<compile_context>
chip_gen: v5e
topology: v5e:2x2
jax: 0.10.0
libtpu: 0.0.40
codegen_flags: <defaults>
</compile_context>

<pallas_src>
import functools

import jax
import jax.numpy as jnp
from jax import lax
from jax.experimental import pallas as pl
from jax.experimental.pallas import tpu as pltpu

_LANE = 128
_ACC_SUBLANES = 64                 # (64,128) f32 accumulator = 8 independent vregs
_MAX_BLOCK_ROWS = 16384            # 8 MiB f32 per input per pipeline buffer
_MAX_OUTER = 2                     # partial-sum groups -> dual-TC split on v7x
_VMEM_LIMIT_BYTES = 48 * 1024 * 1024


def _round_up(value, multiple):
    return ((value + multiple - 1) // multiple) * multiple


def _mse_partial_kernel(x_ref, t_ref, out_ref, *, rows, block_rows, n_inner,
                        n_blocks, ragged):
    """Partial sum of squared differences for one outer partial-sum group.

    Grid = (n_outer, n_inner).  Outer axis is "parallel"; inner axis is
    "arbitrary" and accumulates into the resident (1, 64, 128) output block
    with pure VPU adds (8 independent vreg chains), hidden under the DMA.
    """
    o = pl.program_id(0)
    i = pl.program_id(1)

    @pl.when(i == 0)
    def _():
        out_ref[...] = jnp.zeros_like(out_ref)

    blk = o * n_inner + i            # global block index (never out of range)

    def accumulate(mask_rows):
        d = x_ref[...].astype(jnp.float32) - t_ref[...].astype(jnp.float32)
        sq = d * d
        if mask_rows:
            row_ids = blk * block_rows + lax.broadcasted_iota(
                jnp.int32, (block_rows, _LANE), 0)
            sq = jnp.where(row_ids < rows, sq, 0.0)
        # Fold the block onto 8 independent vreg accumulators (VPU-only adds).
        out_ref[...] += sq.reshape(-1, _ACC_SUBLANES, _LANE).sum(axis=0)[None]

    if not ragged:
        accumulate(False)            # common path: no mask anywhere
    elif n_blocks == 1:
        accumulate(True)             # single (ragged) block
    else:
        @pl.when(blk < n_blocks - 1)
        def _():
            accumulate(False)        # steady state: unmasked

        @pl.when(blk == n_blocks - 1)
        def _():
            accumulate(True)         # ragged epilogue block only


def _mse_aligned_sum(x2, t2, *, max_block_rows):
    """Sum of squared differences over matching (rows, 128) slabs (Pallas)."""
    rows = x2.shape[0]
    block_rows = min(_round_up(max_block_rows, _ACC_SUBLANES),
                     _round_up(rows, _ACC_SUBLANES))
    n_blocks = pl.cdiv(rows, block_rows)
    # Only split the outer axis when it divides exactly: avoids clamped
    # duplicate blocks (redundant DMA).
    n_outer = _MAX_OUTER if (n_blocks % _MAX_OUTER == 0) else 1
    n_inner = n_blocks // n_outer
    ragged = (rows % block_rows) != 0

    kernel = functools.partial(
        _mse_partial_kernel, rows=rows, block_rows=block_rows,
        n_inner=n_inner, n_blocks=n_blocks, ragged=ragged)

    in_map = lambda o, i: (o * n_inner + i, 0)

    elems = rows * _LANE
    cost = pl.CostEstimate(
        flops=3 * elems,
        transcendentals=0,
        bytes_accessed=elems * (x2.dtype.itemsize + t2.dtype.itemsize)
        + n_outer * _ACC_SUBLANES * _LANE * 4)

    partials = pl.pallas_call(
        kernel,
        out_shape=jax.ShapeDtypeStruct((n_outer, _ACC_SUBLANES, _LANE),
                                       jnp.float32),
        grid_spec=pltpu.PrefetchScalarGridSpec(
            num_scalar_prefetch=0,
            grid=(n_outer, n_inner),
            in_specs=[
                pl.BlockSpec((block_rows, _LANE), in_map),
                pl.BlockSpec((block_rows, _LANE), in_map),
            ],
            out_specs=pl.BlockSpec((1, _ACC_SUBLANES, _LANE),
                                   lambda o, i: (o, 0, 0)),
        ),
        compiler_params=pltpu.CompilerParams(
            dimension_semantics=("parallel", "arbitrary"),
            vmem_limit_bytes=_VMEM_LIMIT_BYTES,
        ),
        cost_estimate=cost,
    )(x2, t2)
    # Tiny final fold (<= 2 * 64 * 128 f32) done in plain JAX.
    return jnp.sum(partials)


def _mse_aligned_impl(x, t2d, *, inv_n, max_block_rows):
    rows = t2d.shape[0]
    x2 = x.reshape(rows, _LANE)          # full-array reshape, no slice copy
    return _mse_aligned_sum(x2, t2d, max_block_rows=max_block_rows) * inv_n


def _mse_fallback_impl(x, t_flat_f32, *, inv_n):
    # Lane-misaligned total size: a single fused XLA pass reads x and t exactly
    # once; a Pallas path here would require an aligned-prefix slice that
    # materializes a full extra HBM copy of x per call.
    d = x.reshape(-1).astype(jnp.float32) - t_flat_f32
    return jnp.sum(d * d) * inv_n


class ContentLoss:
    """JAX/Pallas port of the PyTorch ContentLoss module.

    __call__ is an identity passthrough; the scalar MSE against the fixed
    target is stored on `self.loss`.
    """

    def __init__(self, target, *, max_block_rows=_MAX_BLOCK_ROWS):
        target = jax.lax.stop_gradient(jnp.asarray(target))   # .detach()
        self.target = target
        n = int(target.size)
        rows, lane_tail = divmod(n, _LANE)
        inv_n = 1.0 / float(n) if n else 0.0

        if lane_tail == 0 and rows > 0:
            # Preprocess the constant target once into the lane-dense slab.
            self._args = (target.reshape(rows, _LANE),)
            self._mse = jax.jit(functools.partial(
                _mse_aligned_impl, inv_n=inv_n, max_block_rows=max_block_rows))
        else:
            self._args = (target.reshape(-1).astype(jnp.float32),)
            self._mse = jax.jit(functools.partial(
                _mse_fallback_impl, inv_n=inv_n))
        self.loss = None

    def __call__(self, x):
        assert x.shape == self.target.shape, "input / target shape mismatch"
        self.loss = self._mse(x, *self._args)
        return x  # identity passthrough, exactly like the PyTorch module


if __name__ == "__main__":
    key = jax.random.PRNGKey(0)
    k1, k2, k3, k4, k5, k6, k7, k8 = jax.random.split(key, 8)

    # 1) Small NCHW feature map (2048 elems = 16 lane-rows): aligned Pallas
    #    path, single ragged block (block_rows > rows, masked epilogue).
    x = jax.random.normal(k1, (2, 4, 16, 16), dtype=jnp.float32)
    target = jax.random.normal(k2, (2, 4, 16, 16), dtype=jnp.float32)
    module = ContentLoss(target)
    out = jax.block_until_ready(module(x))
    loss = jax.block_until_ready(module.loss)
    ref = jnp.mean((x - target) ** 2)
    assert out.shape == x.shape and bool(jnp.all(out == x))
    assert jnp.allclose(loss, ref, rtol=1e-5, atol=1e-6), (loss, ref)

    # 2) Multi-block aligned path with an even outer split (n_blocks=8 ->
    #    n_outer=2, n_inner=4, no masking), using a small test-only block size.
    x2 = jax.random.normal(k3, (8, 4, 32, 128), dtype=jnp.float32)
    t2 = jax.random.normal(k4, (8, 4, 32, 128), dtype=jnp.float32)
    m2 = ContentLoss(t2, max_block_rows=128)
    m2(x2)
    loss2 = jax.block_until_ready(m2.loss)
    ref2 = jnp.mean((x2 - t2) ** 2)
    assert jnp.allclose(loss2, ref2, rtol=1e-5, atol=1e-6), (loss2, ref2)

    # 3) Multi-block aligned path with odd n_blocks (=3) and a ragged, masked
    #    last block (rows=328, block_rows=128).
    x3 = jax.random.normal(k5, (2, 4, 41, 128), dtype=jnp.float32)
    t3 = jax.random.normal(k6, (2, 4, 41, 128), dtype=jnp.float32)
    m3 = ContentLoss(t3, max_block_rows=128)
    m3(x3)
    loss3 = jax.block_until_ready(m3.loss)
    ref3 = jnp.mean((x3 - t3) ** 2)
    assert jnp.allclose(loss3, ref3, rtol=1e-5, atol=1e-6), (loss3, ref3)

    # 4) Non-128-multiple total size: fused XLA fallback (no extra HBM copy).
    x4 = jax.random.normal(k7, (1, 3, 13, 11), dtype=jnp.float32)
    t4 = jax.random.normal(k8, (1, 3, 13, 11), dtype=jnp.float32)
    m4 = ContentLoss(t4)
    m4(x4)
    loss4 = jax.block_until_ready(m4.loss)
    ref4 = jnp.mean((x4 - t4) ** 2)
    assert jnp.allclose(loss4, ref4, rtol=1e-5, atol=1e-6), (loss4, ref4)

    print("KERNEL_OK")
</pallas_src>

<mosaic_0001>
module attributes {stable_mosaic.version = 11 : i64} {
  func.func @_mse_partial_kernel(%arg0: i32, %arg1: i32, %arg2: memref<64x128xf32, #tpu.memory_space<vmem>>, %arg3: memref<64x128xf32, #tpu.memory_space<vmem>>, %arg4: memref<1x64x128xf32, #tpu.memory_space<vmem>>) attributes {dimension_semantics = [#tpu.dimension_semantics<parallel>, #tpu.dimension_semantics<arbitrary>], iteration_bounds = array<i64: 1, 1>, scalar_prefetch = 0 : i64, scratch_operands = 0 : i64, tpu.core_type = #tpu.core_type<tc>, window_params = [{transform_indices = @transform_0, window_bounds = array<i64: 64, 128>}, {transform_indices = @transform_1, window_bounds = array<i64: 64, 128>}, {transform_indices = @transform_2, window_bounds = array<i64: 1, 64, 128>}]} {
    %c0_i32 = arith.constant 0 : i32
    %0 = arith.cmpi eq, %arg1, %c0_i32 : i32
    %1 = arith.extui %0 : i1 to i32
    %c0_i32_0 = arith.constant 0 : i32
    %2 = arith.cmpi ne, %1, %c0_i32_0 : i32
    scf.if %2 {
      %cst_11 = arith.constant 0.000000e+00 : f32
      %23 = vector.broadcast %cst_11 : f32 to vector<1x64x128xf32>
      %c0_12 = arith.constant 0 : index
      %c0_13 = arith.constant 0 : index
      %c0_14 = arith.constant 0 : index
      %24 = vector.load %arg4[%c0_12, %c0_13, %c0_14] : memref<1x64x128xf32, #tpu.memory_space<vmem>>, vector<1x64x128xf32>
      tpu.vector_store %arg4[%c0_12, %c0_13, %c0_14], %23 {strides = array<i32>} : memref<1x64x128xf32, #tpu.memory_space<vmem>>, vector<1x64x128xf32>,
    } else {
    }
    %c1_i32 = arith.constant 1 : i32
    %3 = arith.muli %arg0, %c1_i32 : i32
    %4 = arith.addi %3, %arg1 : i32
    %c0 = arith.constant 0 : index
    %c0_1 = arith.constant 0 : index
    %5 = vector.load %arg2[%c0, %c0_1] : memref<64x128xf32, #tpu.memory_space<vmem>>, vector<64x128xf32>
    %c0_2 = arith.constant 0 : index
    %c0_3 = arith.constant 0 : index
    %6 = vector.load %arg3[%c0_2, %c0_3] : memref<64x128xf32, #tpu.memory_space<vmem>>, vector<64x128xf32>
    %7 = arith.subf %5, %6 : vector<64x128xf32>
    %8 = arith.mulf %7, %7 : vector<64x128xf32>
    %c64_i32 = arith.constant 64 : i32
    %9 = arith.muli %4, %c64_i32 : i32
    %10 = tpu.iota {dimensions = array<i32: 0>} : vector<64x128xi32>
    %11 = vector.broadcast %9 : i32 to vector<64x128xi32>
    %12 = arith.addi %11, %10 : vector<64x128xi32>
    %c16_i32 = arith.constant 16 : i32
    %13 = vector.broadcast %c16_i32 : i32 to vector<64x128xi32>
    %14 = arith.cmpi slt, %12, %13 : vector<64x128xi32>
    %cst = arith.constant 0.000000e+00 : f32
    %15 = vector.broadcast %cst : f32 to vector<64x128xf32>
    %16 = arith.select %14, %8, %15 : vector<64x128xi1>, vector<64x128xf32>
    %c0_4 = arith.constant 0 : index
    %c0_5 = arith.constant 0 : index
    %c0_6 = arith.constant 0 : index
    %17 = vector.load %arg4[%c0_4, %c0_5, %c0_6] : memref<1x64x128xf32, #tpu.memory_space<vmem>>, vector<1x64x128xf32>
    %18 = vector.shape_cast %16 : vector<64x128xf32> to vector<1x64x128xf32>
    %cst_7 = arith.constant dense<0.000000e+00> : vector<64x128xf32>
    %19 = vector.multi_reduction <add>, %18, %cst_7 [0] : vector<1x64x128xf32> to vector<64x128xf32>
    %20 = vector.shape_cast %19 : vector<64x128xf32> to vector<1x64x128xf32>
    %21 = arith.addf %17, %20 : vector<1x64x128xf32>
    %c0_8 = arith.constant 0 : index
    %c0_9 = arith.constant 0 : index
    %c0_10 = arith.constant 0 : index
    %22 = vector.load %arg4[%c0_8, %c0_9, %c0_10] : memref<1x64x128xf32, #tpu.memory_space<vmem>>, vector<1x64x128xf32>
    tpu.vector_store %arg4[%c0_8, %c0_9, %c0_10], %21 {strides = array<i32>} : memref<1x64x128xf32, #tpu.memory_space<vmem>>, vector<1x64x128xf32>,
    return
  }
  func.func @transform_0(%arg0: i32, %arg1: i32) -> (i32, i32) {
    %c1_i32 = arith.constant 1 : i32
    %0 = arith.muli %arg0, %c1_i32 : i32
    %1 = arith.addi %0, %arg1 : i32
    %c0_i32 = arith.constant 0 : i32
    %c0_i32_0 = arith.constant 0 : i32
    return %1, %c0_i32 : i32, i32
  }
  func.func @transform_1(%arg0: i32, %arg1: i32) -> (i32, i32) {
    %c1_i32 = arith.constant 1 : i32
    %0 = arith.muli %arg0, %c1_i32 : i32
    %1 = arith.addi %0, %arg1 : i32
    %c0_i32 = arith.constant 0 : i32
    %c0_i32_0 = arith.constant 0 : i32
    return %1, %c0_i32 : i32, i32
  }
  func.func @transform_2(%arg0: i32, %arg1: i32) -> (i32, i32, i32) {
    %c0_i32 = arith.constant 0 : i32
    %c0_i32_0 = arith.constant 0 : i32
    %c0_i32_1 = arith.constant 0 : i32
    return %arg0, %c0_i32, %c0_i32_0 : i32, i32, i32
  }
}

</mosaic_0001>

<llo_original>
// kernel: _mse_aligned_impl.1
$region0: #{_mse_aligned_impl.1}
  #allocation0 [shape = 'u32[]', space=smem, size = 0x4, offset = 0x4, fixed_abs, tag = 'smem constant byte address 0x4 - core index']
  #allocation1 [shape = 'u32[72,128]{1,0:T(1,128)}', space=vmem, size = 0x9000, scoped, tag = 'internal scratch']
  %s0 = inlined_call_operand.vmem [shape: f32[16,128], index: 0, kind: input, shape index: {}]
  %s1 = inlined_call_operand.vmem [shape: f32[16,128], index: 1, kind: input, shape index: {}]
  %s2 = inlined_call_operand.vmem [shape: f32[1,64,128], index: 2, kind: output, shape index: {}]
  %s3 = sld [smem:[#allocation0]]
  $region22: #{_mse_aligned_impl.1} parent=0
    _
  %s5 = ssub.s32 1, %s3
  %s6 = scalar_select 0, %s5, %s3
  // Predicated region
  $region2: #{_mse_aligned_impl.1} parent=0 // pred_check
    _
  $region3: #{_mse_aligned_impl.1} parent=0 // pred_check_branch
    %8 = sbr.rel (0) target = $region5
  $region4: #{_mse_aligned_impl.1} parent=0 // pred_region
    %s9 = sadd.s32 0, 0
    %s10 = smul.u32 8, %s9
    %s11 = ssub.s32 2, %s10
    %s12 = smul.u32 8, %s11
    %p13 = scmp.lt.s32.totalorder %s10, 1
    %s14 = scalar_select %p13, %s10, 1
    %s15 = smul.addr %s14, 8
    %s16 = scalar_lea.vmem %s0, %s15
    %s17 = sadd.s32 0, 0
    %s18 = smul.u32 8, %s17
    %s19 = ssub.s32 2, %s18
    %s20 = smul.u32 8, %s19
  $region5: #{_mse_aligned_impl.1} parent=0 // pred_fallthru
    _
  // Predicated region
  $region6: #{_mse_aligned_impl.1} parent=0 // pred_check
    _
  $region7: #{_mse_aligned_impl.1} parent=0 // pred_check_branch
    %22 = sbr.rel (0) target = $region9
  $region8: #{_mse_aligned_impl.1} parent=0 // pred_region
    %s23 = sadd.s32 0, 0
    %s24 = smul.u32 8, %s23
    %s25 = ssub.s32 2, %s24
    %s26 = smul.u32 8, %s25
    %p27 = scmp.lt.s32.totalorder %s24, 1
    %s28 = scalar_select %p27, %s24, 1
    %s29 = smul.addr %s28, 8
    %s30 = scalar_lea.vmem %s1, %s29
    %s31 = sadd.s32 0, 0
    %s32 = smul.u32 8, %s31
    %s33 = ssub.s32 2, %s32
    %s34 = smul.u32 8, %s33
  $region9: #{_mse_aligned_impl.1} parent=0 // pred_fallthru
    _
  %s35 = sadd.s32 0, 0
  %s36 = smul.u32 8, %s35
  %s37 = ssub.s32 2, %s36
  %s38 = smul.u32 8, %s37
  %p39 = scmp.lt.s32.totalorder %s36, 1
  %s40 = scalar_select %p39, %s36, 1
  %s41 = smul.addr %s40, 8
  %s42 = scalar_lea.vmem %s0, %s41
  %s43 = sadd.s32 0, 0
  %s44 = smul.u32 8, %s43
  %s45 = ssub.s32 2, %s44
  %s46 = smul.u32 8, %s45
  %p47 = scmp.lt.s32.totalorder %s44, 1
  %s48 = scalar_select %p47, %s44, 1
  %s49 = smul.addr %s48, 8
  %s50 = scalar_lea.vmem %s1, %s49
  %s51 = sadd.s32 0, 0
  %s52 = smul.u32 8, %s51
  %s53 = ssub.s32 2, %s52
  %s54 = smul.u32 8, %s53
  %p55 = scmp.lt.s32.totalorder %s52, 1
  %s56 = scalar_select %p55, %s52, 1
  %s57 = smul.addr %s56, 8
  %s58 = scalar_lea.vmem %s0, %s57
  %s59 = sadd.s32 0, 0
  %s60 = smul.u32 8, %s59
  %s61 = ssub.s32 2, %s60
  %s62 = smul.u32 8, %s61
  %s63 = sadd.s32 0, 0
  %s64 = smul.u32 8, %s63
  %s65 = ssub.s32 2, %s64
  %s66 = smul.u32 8, %s65
  %p67 = scmp.lt.s32.totalorder %s64, 1
  %s68 = scalar_select %p67, %s64, 1
  %s69 = smul.addr %s68, 8
  %s70 = scalar_lea.vmem %s1, %s69
  %s71 = sadd.s32 0, 0
  %s72 = smul.u32 8, %s71
  %s73 = ssub.s32 2, %s72
  %s74 = smul.u32 8, %s73
  %p75 = scmp.eq.s32.totalorder 0, 0
  // Predicated region
  $region10: #{_mse_aligned_impl.1} parent=0 // pred_check
    %p76 = pneg %p75
  $region11: #{_mse_aligned_impl.1} parent=0 // pred_check_branch
    %78 = sbr.rel (%p76) target = $region13
  $region12: #{_mse_aligned_impl.1} parent=0 // pred_region
    %79 = vst [vmem:[%s2] sm:$0xff] 0.0
    %80 = vst [vmem:[%s2 + $0x8] sm:$0xff] 0.0
    %81 = vst [vmem:[%s2 + $0x10] sm:$0xff] 0.0
    %82 = vst [vmem:[%s2 + $0x18] sm:$0xff] 0.0
    %83 = vst [vmem:[%s2 + $0x20] sm:$0xff] 0.0
    %84 = vst [vmem:[%s2 + $0x28] sm:$0xff] 0.0
    %85 = vst [vmem:[%s2 + $0x30] sm:$0xff] 0.0
    %86 = vst [vmem:[%s2 + $0x38] sm:$0xff] 0.0
  $region13: #{_mse_aligned_impl.1} parent=0 // pred_fallthru
    _
  %s87 = sadd.s32 0, 0
  %v88 = vld [vmem:[%s58] sm:$0xff]
  %v89 = vld [vmem:[%s58 + $0x8] sm:$0xff]
  %v90 = vld [vmem:[%s58 + $0x10] sm:$0xff]
  %v91 = vld [vmem:[%s58 + $0x18] sm:$0xff]
  %v92 = vld [vmem:[%s58 + $0x20] sm:$0xff]
  %v93 = vld [vmem:[%s58 + $0x28] sm:$0xff]
  %v94 = vld [vmem:[%s58 + $0x30] sm:$0xff]
  %v95 = vld [vmem:[%s58 + $0x38] sm:$0xff]
  %v96 = vld [vmem:[%s70] sm:$0xff]
  %v97 = vld [vmem:[%s70 + $0x8] sm:$0xff]
  %v98 = vld [vmem:[%s70 + $0x10] sm:$0xff]
  %v99 = vld [vmem:[%s70 + $0x18] sm:$0xff]
  %v100 = vld [vmem:[%s70 + $0x20] sm:$0xff]
  %v101 = vld [vmem:[%s70 + $0x28] sm:$0xff]
  %v102 = vld [vmem:[%s70 + $0x30] sm:$0xff]
  %v103 = vld [vmem:[%s70 + $0x38] sm:$0xff]
  %v104 = vsub.f32 %v88, %v96
  %v105 = vsub.f32 %v89, %v97
  %v106 = vsub.f32 %v90, %v98
  %v107 = vsub.f32 %v91, %v99
  %v108 = vsub.f32 %v92, %v100
  %v109 = vsub.f32 %v93, %v101
  %v110 = vsub.f32 %v94, %v102
  %v111 = vsub.f32 %v95, %v103
  %v112 = vmul.f32 %v104, %v104
  %v113 = vmul.f32 %v105, %v105
  %v114 = vmul.f32 %v106, %v106
  %v115 = vmul.f32 %v107, %v107
  %v116 = vmul.f32 %v108, %v108
  %v117 = vmul.f32 %v109, %v109
  %v118 = vmul.f32 %v110, %v110
  %v119 = vmul.f32 %v111, %v111
  %s120 = smul.u32 %s87, 64
  %v121 = vlaneseq
  %v122 = vshrl.u32 %v121, 7
  %v123 = vadd.s32 %v122, 8
  %v124 = vadd.s32 %v122, 16
  %v125 = vadd.s32 %v122, 24
  %v126 = vadd.s32 %v122, 32
  %v127 = vadd.s32 %v122, 40
  %v128 = vadd.s32 %v122, 48
  %v129 = vadd.s32 %v122, 56
  %v130 = vstv %s120
  %v131 = vadd.s32 %v130, %v122
  %v132 = vadd.s32 %v130, %v123
  %v133 = vadd.s32 %v130, %v124
  %v134 = vadd.s32 %v130, %v125
  %v135 = vadd.s32 %v130, %v126
  %v136 = vadd.s32 %v130, %v127
  %v137 = vadd.s32 %v130, %v128
  %v138 = vadd.s32 %v130, %v129
  %vm139 = vcmp.lt.s32.totalorder %v131, 16
  %vm140 = vcmp.lt.s32.totalorder %v132, 16
  %vm141 = vcmp.lt.s32.totalorder %v133, 16
  %vm142 = vcmp.lt.s32.totalorder %v134, 16
  %vm143 = vcmp.lt.s32.totalorder %v135, 16
  %vm144 = vcmp.lt.s32.totalorder %v136, 16
  %vm145 = vcmp.lt.s32.totalorder %v137, 16
  %vm146 = vcmp.lt.s32.totalorder %v138, 16
  %v147 = vsel %vm139, %v112, 0.0
  %v148 = vsel %vm140, %v113, 0.0
  %v149 = vsel %vm141, %v114, 0.0
  %v150 = vsel %vm142, %v115, 0.0
  %v151 = vsel %vm143, %v116, 0.0
  %v152 = vsel %vm144, %v117, 0.0
  %v153 = vsel %vm145, %v118, 0.0
  %v154 = vsel %vm146, %v119, 0.0
  %v155 = vld [vmem:[%s2] sm:$0xff]
  %v156 = vld [vmem:[%s2 + $0x8] sm:$0xff]
  %v157 = vld [vmem:[%s2 + $0x10] sm:$0xff]
  %v158 = vld [vmem:[%s2 + $0x18] sm:$0xff]
  %v159 = vld [vmem:[%s2 + $0x20] sm:$0xff]
  %v160 = vld [vmem:[%s2 + $0x28] sm:$0xff]
  %v161 = vld [vmem:[%s2 + $0x30] sm:$0xff]
  %v162 = vld [vmem:[%s2 + $0x38] sm:$0xff]
  %v163 = vadd.f32 %v147, 0.0
  %v164 = vadd.f32 %v148, 0.0
  %v165 = vadd.f32 %v149, 0.0
  %v166 = vadd.f32 %v150, 0.0
  %v167 = vadd.f32 %v151, 0.0
  %v168 = vadd.f32 %v152, 0.0
  %v169 = vadd.f32 %v153, 0.0
  %v170 = vadd.f32 %v154, 0.0
  %v171 = vadd.f32 %v155, %v163
  %v172 = vadd.f32 %v156, %v164
  %v173 = vadd.f32 %v157, %v165
  %v174 = vadd.f32 %v158, %v166
  %v175 = vadd.f32 %v159, %v167
  %v176 = vadd.f32 %v160, %v168
  %v177 = vadd.f32 %v161, %v169
  %v178 = vadd.f32 %v162, %v170
  %179 = vst [vmem:[%s2] sm:$0xff] %v171
  %180 = vst [vmem:[%s2 + $0x8] sm:$0xff] %v172
  %181 = vst [vmem:[%s2 + $0x10] sm:$0xff] %v173
  %182 = vst [vmem:[%s2 + $0x18] sm:$0xff] %v174
  %183 = vst [vmem:[%s2 + $0x20] sm:$0xff] %v175
  %184 = vst [vmem:[%s2 + $0x28] sm:$0xff] %v176
  %185 = vst [vmem:[%s2 + $0x30] sm:$0xff] %v177
  %186 = vst [vmem:[%s2 + $0x38] sm:$0xff] %v178
  // Predicated region
  $region14: #{_mse_aligned_impl.1} parent=0 // pred_check
    _
  $region15: #{_mse_aligned_impl.1} parent=0 // pred_check_branch
    %188 = sbr.rel (0) target = $region17
  $region16: #{_mse_aligned_impl.1} parent=0 // pred_region
    _
  $region17: #{_mse_aligned_impl.1} parent=0 // pred_fallthru
    _
  // Predicated region
  $region18: #{_mse_aligned_impl.1} parent=0 // pred_check
    _
  $region19: #{_mse_aligned_impl.1} parent=0 // pred_check_branch
    %190 = sbr.rel (0) target = $region21
  $region20: #{_mse_aligned_impl.1} parent=0 // pred_region
    _
  $region21: #{_mse_aligned_impl.1} parent=0 // pred_fallthru
    _

</llo_original>
